<compile_context>
chip_gen: v5e
topology: v5e:2x2
jax: 0.10.0
libtpu: 0.0.40
codegen_flags: <defaults>
</compile_context>

<pallas_src>
import functools

import numpy as np
import jax
import jax.numpy as jnp
from jax import lax
from jax.experimental import pallas as pl
from jax.experimental.pallas import tpu as pltpu


def _tap_masks(H, W, C):
    """(9*C, H*W) f32 mask: rows [t*C:(t+1)*C] are the validity mask of tap t."""
    hw = H * W
    p = np.arange(hw)
    h, w = p // W, p % W
    blocks = []
    for dh in (-1, 0, 1):
        for dw in (-1, 0, 1):
            valid = (h + dh >= 0) & (h + dh < H) & (w + dw >= 0) & (w + dw < W)
            blocks.append(np.broadcast_to(valid, (C, hw)))
    return jnp.asarray(np.concatenate(blocks, axis=0).astype(np.float32))


def _rcab_kernel(x_ref, mask_ref, w1_ref, b1_ref, w2_ref, b2_ref,
                 wd_ref, bd_ref, wu_ref, bu_ref, o_ref, *, offsets, hw):
    xt = x_ref[0].astype(jnp.float32)       # (C, H*W)   lane-dense slab
    mask = mask_ref[...]                    # (9C, H*W)  resident boundary mask

    def conv3x3(img, w_ref, b_ref):
        # Build the 9 shifted taps with lane rolls (XLU), zero out-of-image
        # positions with the precomputed mask, then contract all taps with a
        # single (C, 9C) x (9C, H*W) MXU matmul.  Bias added once at the end.
        pieces = [img if off == 0 else pltpu.roll(img, shift=(-off) % hw, axis=1)
                  for off in offsets]
        taps = jnp.concatenate(pieces, axis=0) * mask          # (9C, H*W)
        return jnp.dot(w_ref[...], taps,
                       preferred_element_type=jnp.float32) + b_ref[...]

    y1 = jnp.maximum(conv3x3(xt, w1_ref, b1_ref), 0.0)         # conv1 + ReLU
    y2 = conv3x3(y1, w2_ref, b2_ref)                           # conv2

    # Channel attention (CALayer): global avg pool + squeeze/excite entirely on
    # the VPU/XLU — no 1-row MXU matmuls.
    pooled = jnp.mean(y2, axis=1, keepdims=True)                        # (C, 1)
    hidden = jnp.maximum(
        jnp.sum(pooled * wd_ref[...], axis=0, keepdims=True) + bd_ref[...],
        0.0)                                                            # (1, C/r)
    gate = jax.nn.sigmoid(
        jnp.sum(hidden * wu_ref[...], axis=1, keepdims=True) + bu_ref[...])  # (C, 1)

    o_ref[0] = (xt + y2 * gate).astype(o_ref.dtype)            # residual add


def rcab_forward(x_nchw, params):
    """x_nchw: (N, C, H, W) float32 -> (N, C, H, W) float32."""
    w1, b1, w2, b2, wd, bd, wu, bu = params
    N, C, H, W = x_nchw.shape
    Cr = wd.shape[1]
    hw = H * W

    x = x_nchw.reshape(N, C, hw)            # channel-major, lane-dense last dim
    mask = _tap_masks(H, W, C)              # (9C, hw)

    # Pack each HWIO conv weight as (C_out, 9*C_in), rows tap-major, matching
    # the order the kernel stacks the shifted taps.
    w1c = w1.reshape(9 * C, C).T
    w2c = w2.reshape(9 * C, C).T
    b1c = b1.reshape(C, 1)
    b2c = b2.reshape(C, 1)
    wuT = wu.T                               # (C, Cr)
    buc = bu.reshape(C, 1)

    offsets = tuple(dh * W + dw for dh in (-1, 0, 1) for dw in (-1, 0, 1))
    kernel = functools.partial(_rcab_kernel, offsets=offsets, hw=hw)

    rep = lambda n: (0, 0)   # constant block -> DMA'd once, resident in VMEM

    out = pl.pallas_call(
        kernel,
        out_shape=jax.ShapeDtypeStruct((N, C, hw), x_nchw.dtype),
        grid_spec=pltpu.PrefetchScalarGridSpec(
            num_scalar_prefetch=0,
            grid=(N,),
            in_specs=[
                pl.BlockSpec((1, C, hw), lambda n: (n, 0, 0)),   # x (one image)
                pl.BlockSpec((9 * C, hw), rep),                  # tap masks
                pl.BlockSpec((C, 9 * C), rep),                   # w1 (packed)
                pl.BlockSpec((C, 1), rep),                       # b1
                pl.BlockSpec((C, 9 * C), rep),                   # w2 (packed)
                pl.BlockSpec((C, 1), rep),                       # b2
                pl.BlockSpec((C, Cr), rep),                      # wd (1x1 down)
                pl.BlockSpec((1, Cr), rep),                      # bd
                pl.BlockSpec((C, Cr), rep),                      # wu^T (1x1 up)
                pl.BlockSpec((C, 1), rep),                       # bu
            ],
            out_specs=pl.BlockSpec((1, C, hw), lambda n: (n, 0, 0)),
        ),
        compiler_params=pltpu.CompilerParams(
            dimension_semantics=("parallel",)),
    )(x, mask, w1c, b1c, w2c, b2c, wd, bd, wuT, buc)

    return out.reshape(N, C, H, W)


def rcab_reference(x_nchw, params):
    """Pure-JAX reference (HIGHEST-precision convs) for validation."""
    w1, b1, w2, b2, wd, bd, wu, bu = params
    x = jnp.transpose(x_nchw, (0, 2, 3, 1))             # NHWC
    dn = lax.conv_dimension_numbers(x.shape, w1.shape, ("NHWC", "HWIO", "NHWC"))

    def conv(inp, w, b):
        y = lax.conv_general_dilated(inp, w, (1, 1), "SAME", dimension_numbers=dn,
                                     precision=lax.Precision.HIGHEST)
        return y + b.reshape(1, 1, 1, -1)

    y = jnp.maximum(conv(x, w1, b1), 0.0)
    y = conv(y, w2, b2)
    pooled = jnp.mean(y, axis=(1, 2))                                   # (N, C)
    h = jnp.maximum(pooled @ wd + bd, 0.0)
    g = jax.nn.sigmoid(h @ wu + bu)                                     # (N, C)
    out = x + y * g[:, None, None, :]
    return jnp.transpose(out, (0, 3, 1, 2))


def init_params(key, n_feat, reduction=8):
    cr = n_feat // reduction
    ks = jax.random.split(key, 8)
    scale = 0.1
    w1 = scale * jax.random.normal(ks[0], (3, 3, n_feat, n_feat), jnp.float32)
    b1 = scale * jax.random.normal(ks[1], (1, n_feat), jnp.float32)
    w2 = scale * jax.random.normal(ks[2], (3, 3, n_feat, n_feat), jnp.float32)
    b2 = scale * jax.random.normal(ks[3], (1, n_feat), jnp.float32)
    wd = scale * jax.random.normal(ks[4], (n_feat, cr), jnp.float32)
    bd = scale * jax.random.normal(ks[5], (1, cr), jnp.float32)
    wu = scale * jax.random.normal(ks[6], (cr, n_feat), jnp.float32)
    bu = scale * jax.random.normal(ks[7], (1, n_feat), jnp.float32)
    return (w1, b1, w2, b2, wd, bd, wu, bu)


if __name__ == "__main__":
    key = jax.random.PRNGKey(0)
    k_x, k_p = jax.random.split(key)

    N, C, H, W = 2, 16, 16, 16           # n_feat=16, reduction=8 -> hidden=2
    x = jax.random.normal(k_x, (N, C, H, W), jnp.float32)
    params = init_params(k_p, C, reduction=8)

    out = jax.block_until_ready(rcab_forward(x, params))
    ref = jax.block_until_ready(rcab_reference(x, params))

    assert out.shape == x.shape and out.dtype == x.dtype
    err = jnp.max(jnp.abs(out - ref))
    # Kernel matmuls run at default MXU precision (bf16 passes, f32 accumulate)
    # while the reference uses HIGHEST, so allow a few e-2 of drift.
    assert jnp.allclose(out, ref, atol=5e-2, rtol=5e-2), f"max abs err {err}"
    print("KERNEL_OK")
</pallas_src>

<mosaic_0001>
module attributes {stable_mosaic.version = 11 : i64} {
  func.func @_rcab_kernel(%arg0: i32, %arg1: memref<1x16x256xf32, #tpu.memory_space<vmem>>, %arg2: memref<144x256xf32, #tpu.memory_space<vmem>>, %arg3: memref<16x144xf32, #tpu.memory_space<vmem>>, %arg4: memref<16x1xf32, #tpu.memory_space<vmem>>, %arg5: memref<16x144xf32, #tpu.memory_space<vmem>>, %arg6: memref<16x1xf32, #tpu.memory_space<vmem>>, %arg7: memref<16x2xf32, #tpu.memory_space<vmem>>, %arg8: memref<1x2xf32, #tpu.memory_space<vmem>>, %arg9: memref<16x2xf32, #tpu.memory_space<vmem>>, %arg10: memref<16x1xf32, #tpu.memory_space<vmem>>, %arg11: memref<1x16x256xf32, #tpu.memory_space<vmem>>) attributes {dimension_semantics = [#tpu.dimension_semantics<parallel>], iteration_bounds = array<i64: 2>, scalar_prefetch = 0 : i64, scratch_operands = 0 : i64, tpu.core_type = #tpu.core_type<tc>, window_params = [{transform_indices = @transform_0, window_bounds = array<i64: 1, 16, 256>}, {pipeline_mode = #tpu.pipeline_mode<synchronous>, transform_indices = @transform_1, window_bounds = array<i64: 144, 256>}, {pipeline_mode = #tpu.pipeline_mode<synchronous>, transform_indices = @transform_2, window_bounds = array<i64: 16, 144>}, {pipeline_mode = #tpu.pipeline_mode<synchronous>, transform_indices = @transform_3, window_bounds = array<i64: 16, 1>}, {pipeline_mode = #tpu.pipeline_mode<synchronous>, transform_indices = @transform_4, window_bounds = array<i64: 16, 144>}, {pipeline_mode = #tpu.pipeline_mode<synchronous>, transform_indices = @transform_5, window_bounds = array<i64: 16, 1>}, {pipeline_mode = #tpu.pipeline_mode<synchronous>, transform_indices = @transform_6, window_bounds = array<i64: 16, 2>}, {pipeline_mode = #tpu.pipeline_mode<synchronous>, transform_indices = @transform_7, window_bounds = array<i64: 1, 2>}, {pipeline_mode = #tpu.pipeline_mode<synchronous>, transform_indices = @transform_8, window_bounds = array<i64: 16, 2>}, {pipeline_mode = #tpu.pipeline_mode<synchronous>, transform_indices = @transform_9, window_bounds = array<i64: 16, 1>}, {transform_indices = @transform_10, window_bounds = array<i64: 1, 16, 256>}]} {
    %c0 = arith.constant 0 : index
    %c0_0 = arith.constant 0 : index
    %c0_1 = arith.constant 0 : index
    %0 = vector.load %arg1[%c0, %c0_0, %c0_1] : memref<1x16x256xf32, #tpu.memory_space<vmem>>, vector<1x16x256xf32>
    %1 = vector.shape_cast %0 : vector<1x16x256xf32> to vector<16x256xf32>
    %c0_2 = arith.constant 0 : index
    %c0_3 = arith.constant 0 : index
    %2 = vector.load %arg2[%c0_2, %c0_3] : memref<144x256xf32, #tpu.memory_space<vmem>>, vector<144x256xf32>
    %c17_i32 = arith.constant 17 : i32
    %3 = tpu.dynamic_rotate %1 by %c17_i32 dim 1 : vector<16x256xf32>, i32 -> vector<16x256xf32>
    %c16_i32 = arith.constant 16 : i32
    %4 = tpu.dynamic_rotate %1 by %c16_i32 dim 1 : vector<16x256xf32>, i32 -> vector<16x256xf32>
    %c15_i32 = arith.constant 15 : i32
    %5 = tpu.dynamic_rotate %1 by %c15_i32 dim 1 : vector<16x256xf32>, i32 -> vector<16x256xf32>
    %c1_i32 = arith.constant 1 : i32
    %6 = tpu.dynamic_rotate %1 by %c1_i32 dim 1 : vector<16x256xf32>, i32 -> vector<16x256xf32>
    %c255_i32 = arith.constant 255 : i32
    %7 = tpu.dynamic_rotate %1 by %c255_i32 dim 1 : vector<16x256xf32>, i32 -> vector<16x256xf32>
    %c241_i32 = arith.constant 241 : i32
    %8 = tpu.dynamic_rotate %1 by %c241_i32 dim 1 : vector<16x256xf32>, i32 -> vector<16x256xf32>
    %c240_i32 = arith.constant 240 : i32
    %9 = tpu.dynamic_rotate %1 by %c240_i32 dim 1 : vector<16x256xf32>, i32 -> vector<16x256xf32>
    %c239_i32 = arith.constant 239 : i32
    %10 = tpu.dynamic_rotate %1 by %c239_i32 dim 1 : vector<16x256xf32>, i32 -> vector<16x256xf32>
    %11 = tpu.concatenate %3, %4, %5, %6, %1, %7, %8, %9, %10 in 0 : vector<16x256xf32>, vector<16x256xf32>, vector<16x256xf32>, vector<16x256xf32>, vector<16x256xf32>, vector<16x256xf32>, vector<16x256xf32>, vector<16x256xf32>, vector<16x256xf32> -> vector<144x256xf32>
    %12 = arith.mulf %11, %2 : vector<144x256xf32>
    %c0_4 = arith.constant 0 : index
    %c0_5 = arith.constant 0 : index
    %13 = vector.load %arg3[%c0_4, %c0_5] : memref<16x144xf32, #tpu.memory_space<vmem>>, vector<16x144xf32>
    %cst = arith.constant dense<0.000000e+00> : vector<16x256xf32>
    %14 = tpu.matmul %13, %12, %cst {dimension_numbers = #tpu.dot_dimension_numbers<[1], [0], [0], [1], [0, 0, 1, 1], [], []>} : vector<16x144xf32>, vector<144x256xf32>, vector<16x256xf32> -> vector<16x256xf32>
    %c0_6 = arith.constant 0 : index
    %c0_7 = arith.constant 0 : index
    %15 = vector.load %arg4[%c0_6, %c0_7] : memref<16x1xf32, #tpu.memory_space<vmem>>, vector<16x1xf32>
    %16 = vector.broadcast %15 : vector<16x1xf32> to vector<16x256xf32>
    %17 = arith.addf %14, %16 : vector<16x256xf32>
    %cst_8 = arith.constant 0.000000e+00 : f32
    %18 = vector.broadcast %cst_8 : f32 to vector<16x256xf32>
    %19 = arith.maximumf %17, %18 : vector<16x256xf32>
    %c17_i32_9 = arith.constant 17 : i32
    %20 = tpu.dynamic_rotate %19 by %c17_i32_9 dim 1 : vector<16x256xf32>, i32 -> vector<16x256xf32>
    %c16_i32_10 = arith.constant 16 : i32
    %21 = tpu.dynamic_rotate %19 by %c16_i32_10 dim 1 : vector<16x256xf32>, i32 -> vector<16x256xf32>
    %c15_i32_11 = arith.constant 15 : i32
    %22 = tpu.dynamic_rotate %19 by %c15_i32_11 dim 1 : vector<16x256xf32>, i32 -> vector<16x256xf32>
    %c1_i32_12 = arith.constant 1 : i32
    %23 = tpu.dynamic_rotate %19 by %c1_i32_12 dim 1 : vector<16x256xf32>, i32 -> vector<16x256xf32>
    %c255_i32_13 = arith.constant 255 : i32
    %24 = tpu.dynamic_rotate %19 by %c255_i32_13 dim 1 : vector<16x256xf32>, i32 -> vector<16x256xf32>
    %c241_i32_14 = arith.constant 241 : i32
    %25 = tpu.dynamic_rotate %19 by %c241_i32_14 dim 1 : vector<16x256xf32>, i32 -> vector<16x256xf32>
    %c240_i32_15 = arith.constant 240 : i32
    %26 = tpu.dynamic_rotate %19 by %c240_i32_15 dim 1 : vector<16x256xf32>, i32 -> vector<16x256xf32>
    %c239_i32_16 = arith.constant 239 : i32
    %27 = tpu.dynamic_rotate %19 by %c239_i32_16 dim 1 : vector<16x256xf32>, i32 -> vector<16x256xf32>
    %28 = tpu.concatenate %20, %21, %22, %23, %19, %24, %25, %26, %27 in 0 : vector<16x256xf32>, vector<16x256xf32>, vector<16x256xf32>, vector<16x256xf32>, vector<16x256xf32>, vector<16x256xf32>, vector<16x256xf32>, vector<16x256xf32>, vector<16x256xf32> -> vector<144x256xf32>
    %29 = arith.mulf %28, %2 : vector<144x256xf32>
    %c0_17 = arith.constant 0 : index
    %c0_18 = arith.constant 0 : index
    %30 = vector.load %arg5[%c0_17, %c0_18] : memref<16x144xf32, #tpu.memory_space<vmem>>, vector<16x144xf32>
    %cst_19 = arith.constant dense<0.000000e+00> : vector<16x256xf32>
    %31 = tpu.matmul %30, %29, %cst_19 {dimension_numbers = #tpu.dot_dimension_numbers<[1], [0], [0], [1], [0, 0, 1, 1], [], []>} : vector<16x144xf32>, vector<144x256xf32>, vector<16x256xf32> -> vector<16x256xf32>
    %c0_20 = arith.constant 0 : index
    %c0_21 = arith.constant 0 : index
    %32 = vector.load %arg6[%c0_20, %c0_21] : memref<16x1xf32, #tpu.memory_space<vmem>>, vector<16x1xf32>
    %33 = vector.broadcast %32 : vector<16x1xf32> to vector<16x256xf32>
    %34 = arith.addf %31, %33 : vector<16x256xf32>
    %cst_22 = arith.constant dense<0.000000e+00> : vector<16xf32>
    %35 = vector.multi_reduction <add>, %34, %cst_22 [1] : vector<16x256xf32> to vector<16xf32>
    %36 = vector.shape_cast %35 : vector<16xf32> to vector<16x1xf32>
    %cst_23 = arith.constant 2.560000e+02 : f32
    %37 = vector.broadcast %cst_23 : f32 to vector<16x1xf32>
    %38 = arith.divf %36, %37 : vector<16x1xf32>
    %c0_24 = arith.constant 0 : index
    %c0_25 = arith.constant 0 : index
    %39 = vector.load %arg7[%c0_24, %c0_25] : memref<16x2xf32, #tpu.memory_space<vmem>>, vector<16x2xf32>
    %40 = vector.broadcast %38 : vector<16x1xf32> to vector<16x2xf32>
    %41 = arith.mulf %40, %39 : vector<16x2xf32>
    %cst_26 = arith.constant dense<0.000000e+00> : vector<2xf32>
    %42 = vector.multi_reduction <add>, %41, %cst_26 [0] : vector<16x2xf32> to vector<2xf32>
    %43 = vector.shape_cast %42 : vector<2xf32> to vector<1x2xf32>
    %c0_27 = arith.constant 0 : index
    %c0_28 = arith.constant 0 : index
    %44 = vector.load %arg8[%c0_27, %c0_28] : memref<1x2xf32, #tpu.memory_space<vmem>>, vector<1x2xf32>
    %45 = arith.addf %43, %44 : vector<1x2xf32>
    %cst_29 = arith.constant 0.000000e+00 : f32
    %46 = vector.broadcast %cst_29 : f32 to vector<1x2xf32>
    %47 = arith.maximumf %45, %46 : vector<1x2xf32>
    %c0_30 = arith.constant 0 : index
    %c0_31 = arith.constant 0 : index
    %48 = vector.load %arg9[%c0_30, %c0_31] : memref<16x2xf32, #tpu.memory_space<vmem>>, vector<16x2xf32>
    %49 = vector.broadcast %47 : vector<1x2xf32> to vector<16x2xf32>
    %50 = arith.mulf %49, %48 : vector<16x2xf32>
    %cst_32 = arith.constant dense<0.000000e+00> : vector<16xf32>
    %51 = vector.multi_reduction <add>, %50, %cst_32 [1] : vector<16x2xf32> to vector<16xf32>
    %52 = vector.shape_cast %51 : vector<16xf32> to vector<16x1xf32>
    %c0_33 = arith.constant 0 : index
    %c0_34 = arith.constant 0 : index
    %53 = vector.load %arg10[%c0_33, %c0_34] : memref<16x1xf32, #tpu.memory_space<vmem>>, vector<16x1xf32>
    %54 = arith.addf %52, %53 : vector<16x1xf32>
    %55 = arith.negf %54 : vector<16x1xf32>
    %56 = math.exp %55 : vector<16x1xf32>
    %cst_35 = arith.constant 1.000000e+00 : f32
    %57 = vector.broadcast %cst_35 : f32 to vector<16x1xf32>
    %58 = arith.addf %57, %56 : vector<16x1xf32>
    %59 = arith.divf %57, %58 : vector<16x1xf32>
    %60 = vector.broadcast %59 : vector<16x1xf32> to vector<16x256xf32>
    %61 = arith.mulf %34, %60 : vector<16x256xf32>
    %62 = arith.addf %1, %61 : vector<16x256xf32>
    %c0_36 = arith.constant 0 : index
    %c0_37 = arith.constant 0 : index
    %c0_38 = arith.constant 0 : index
    %63 = vector.load %arg11[%c0_36, %c0_37, %c0_38] : memref<1x16x256xf32, #tpu.memory_space<vmem>>, vector<1x16x256xf32>
    %64 = vector.shape_cast %63 : vector<1x16x256xf32> to vector<16x256xf32>
    %65 = vector.shape_cast %62 : vector<16x256xf32> to vector<1x16x256xf32>
    tpu.vector_store %arg11[%c0_36, %c0_37, %c0_38], %65 {strides = array<i32>} : memref<1x16x256xf32, #tpu.memory_space<vmem>>, vector<1x16x256xf32>,
    return
  }
  func.func @transform_0(%arg0: i32) -> (i32, i32, i32) {
    %c0_i32 = arith.constant 0 : i32
    %c0_i32_0 = arith.constant 0 : i32
    %c0_i32_1 = arith.constant 0 : i32
    return %arg0, %c0_i32, %c0_i32_0 : i32, i32, i32
  }
  func.func @transform_1(%arg0: i32) -> (i32, i32) {
    %c0_i32 = arith.constant 0 : i32
    %c0_i32_0 = arith.constant 0 : i32
    %c0_i32_1 = arith.constant 0 : i32
    return %c0_i32, %c0_i32_0 : i32, i32
  }
  func.func @transform_2(%arg0: i32) -> (i32, i32) {
    %c0_i32 = arith.constant 0 : i32
    %c0_i32_0 = arith.constant 0 : i32
    %c0_i32_1 = arith.constant 0 : i32
    return %c0_i32, %c0_i32_0 : i32, i32
  }
  func.func @transform_3(%arg0: i32) -> (i32, i32) {
    %c0_i32 = arith.constant 0 : i32
    %c0_i32_0 = arith.constant 0 : i32
    %c0_i32_1 = arith.constant 0 : i32
    return %c0_i32, %c0_i32_0 : i32, i32
  }
  func.func @transform_4(%arg0: i32) -> (i32, i32) {
    %c0_i32 = arith.constant 0 : i32
    %c0_i32_0 = arith.constant 0 : i32
    %c0_i32_1 = arith.constant 0 : i32
    return %c0_i32, %c0_i32_0 : i32, i32
  }
  func.func @transform_5(%arg0: i32) -> (i32, i32) {
    %c0_i32 = arith.constant 0 : i32
    %c0_i32_0 = arith.constant 0 : i32
    %c0_i32_1 = arith.constant 0 : i32
    return %c0_i32, %c0_i32_0 : i32, i32
  }
  func.func @transform_6(%arg0: i32) -> (i32, i32) {
    %c0_i32 = arith.constant 0 : i32
    %c0_i32_0 = arith.constant 0 : i32
    %c0_i32_1 = arith.constant 0 : i32
    return %c0_i32, %c0_i32_0 : i32, i32
  }
  func.func @transform_7(%arg0: i32) -> (i32, i32) {
    %c0_i32 = arith.constant 0 : i32
    %c0_i32_0 = arith.constant 0 : i32
    %c0_i32_1 = arith.constant 0 : i32
    return %c0_i32, %c0_i32_0 : i32, i32
  }
  func.func @transform_8(%arg0: i32) -> (i32, i32) {
    %c0_i32 = arith.constant 0 : i32
    %c0_i32_0 = arith.constant 0 : i32
    %c0_i32_1 = arith.constant 0 : i32
    return %c0_i32, %c0_i32_0 : i32, i32
  }
  func.func @transform_9(%arg0: i32) -> (i32, i32) {
    %c0_i32 = arith.constant 0 : i32
    %c0_i32_0 = arith.constant 0 : i32
    %c0_i32_1 = arith.constant 0 : i32
    return %c0_i32, %c0_i32_0 : i32, i32
  }
  func.func @transform_10(%arg0: i32) -> (i32, i32, i32) {
    %c0_i32 = arith.constant 0 : i32
    %c0_i32_0 = arith.constant 0 : i32
    %c0_i32_1 = arith.constant 0 : i32
    return %arg0, %c0_i32, %c0_i32_0 : i32, i32, i32
  }
}

</mosaic_0001>

<llo_original>
// kernel: tpu_custom_call.1
$region0: #{tpu_custom_call.1}
  #allocation0 [shape = 'u32[]', space=smem, size = 0x4, offset = 0x4, fixed_abs, tag = 'smem constant byte address 0x4 - core index']
  #allocation1 [shape = 'u32[72,128]{1,0:T(1,128)}', space=vmem, size = 0x9000, scoped, tag = 'internal scratch']
  %s0 = inlined_call_operand.hbm [shape: f32[2,16,256], index: 0, kind: input, shape index: {}]
  %s1 = inlined_call_operand.hbm [shape: f32[144,256], index: 1, kind: input, shape index: {}]
  %s2 = inlined_call_operand.vmem [shape: f32[16,144], index: 2, kind: input, shape index: {}]
  %s3 = inlined_call_operand.vmem [shape: f32[16,1], index: 3, kind: input, shape index: {}]
  %s4 = inlined_call_operand.hbm [shape: f32[16,144], index: 4, kind: input, shape index: {}]
  %s5 = inlined_call_operand.vmem [shape: f32[16,1], index: 5, kind: input, shape index: {}]
  %s6 = inlined_call_operand.vmem [shape: f32[16,2], index: 6, kind: input, shape index: {}]
  %s7 = inlined_call_operand.vmem [shape: f32[1,2], index: 7, kind: input, shape index: {}]
  %s8 = inlined_call_operand.vmem [shape: f32[16,2], index: 8, kind: input, shape index: {}]
  %s9 = inlined_call_operand.vmem [shape: f32[16,1], index: 9, kind: input, shape index: {}]
  %s10 = inlined_call_operand.hbm [shape: f32[2,16,256], index: 10, kind: output, shape index: {}]
  %s11 = sld [smem:[#allocation0]]
  $region85: #{tpu_custom_call.1} parent=0
    _
  %s13 = ssub.s32 1, %s11
  %s14 = scalar_select 0, %s13, %s11
  $region1: #{tpu_custom_call.1} parent=0
    #allocation2 [shape = 'u8[32768]{0}', space=vmem, size = 0x8000, scoped, tag = 'input window, operand 0']
    #allocation3 [shape = 's32[2]{0}', space=sflag, size = 0x8, scoped, tag = 'scoped memory for tpu_custom_call.1']
    #allocation4 [shape = 's32[2]{0}', space=sflag, size = 0x8, scoped, tag = 'scoped memory for tpu_custom_call.1']
    #allocation5 [shape = 'u8[147456]{0}', space=vmem, size = 0x24000, scoped, tag = 'input window, operand 1, single buffered']
    #allocation6 [shape = 's32[1]{0}', space=sflag, size = 0x4, scoped, tag = 'scoped memory for tpu_custom_call.1']
    #allocation7 [shape = 'u8[16384]{0}', space=vmem, size = 0x4000, scoped, tag = 'input window, operand 4, single buffered']
    #allocation8 [shape = 'u8[32768]{0}', space=vmem, size = 0x8000, scoped, tag = 'output window, operand 0']
    %15 = vsyncpa [#allocation3], 0
    %s16 = scalar_lea.sflag [#allocation3], 1
    %17 = vsyncpa %s16, 0
    %18 = vsyncpa [#allocation6], 0
    %19 = vsyncpa [#allocation4], 0
    %s20 = scalar_lea.sflag [#allocation4], 1
    %21 = vsyncpa %s20, 0
    loop: start=0, step=1, limit=4
    $region2: #{tpu_custom_call.1} parent=1 // loop_pre_header
      _
    $region3: #{tpu_custom_call.1} parent=1 // loop_header
      %s23 = sphi 0, %s27
      %p24 = scmp.ge.s32.totalorder %s23, 4
      %s33 = sphi 0, %s35
      %s36 = sphi 0, %s33
      %s37 = sphi 0, %s36
      %s53 = sphi 0, %s37
      %s57 = sphi 0, %s57
      %s59 = sphi 0, %s57
      %s60 = sphi 0, %s59
      %s74 = sphi 0, %s60
      %s78 = sphi 0, %s78
      %s80 = sphi 0, %s78
      %s81 = sphi 0, %s80
      %s95 = sphi 0, %s81
      %s99 = sphi 0, %s99
      %s101 = sphi 0, %s99
      %s102 = sphi 0, %s101
      %s116 = sphi 0, %s102
      %s120 = sphi 0, %s120
      %s122 = sphi 0, %s120
      %s123 = sphi 0, %s122
      %s137 = sphi 0, %s123
      %s141 = sphi 0, %s141
      %s143 = sphi 0, %s141
      %s144 = sphi 0, %s143
      %s158 = sphi 0, %s144
      %s162 = sphi 0, %s162
      %s164 = sphi 0, %s162
      %s165 = sphi 0, %s164
      %s179 = sphi 0, %s165
      %s183 = sphi 0, %s183
      %s185 = sphi 0, %s183
      %s186 = sphi 0, %s185
      %s200 = sphi 0, %s186
      %s204 = sphi 0, %s204
      %s206 = sphi 0, %s204
      %s207 = sphi 0, %s206
      %s221 = sphi 0, %s207
      %s225 = sphi 0, %s225
      %s227 = sphi 0, %s225
      %s228 = sphi 0, %s227
      %s242 = sphi 0, %s228
      %s248 = sphi 0, %s250
      %s251 = sphi 0, %s248
      %s252 = sphi 0, %s251
      %s268 = sphi 0, %s252
    $region4: #{tpu_custom_call.1} parent=1 // loop_header_branch
      %26 = sbr.rel (%p24) target = $region8
    $region5: #{tpu_custom_call.1} parent=1 // loop_body
      %s28 = ssub.s32 %s23, 1
      %s29 = ssub.s32 %s23, 2
      %s30 = sadd.s32 %s23, 1
      %s31 = ssub.s32 %s23, %s30
      %p32 = scmp.eq.s32.totalorder %s31, 0
      %s34 = sadd.s32 %s33, 1
      %s35 = scalar_select %p32, %s33, %s34
      %p38 = pneg %p32
      %p39 = scmp.eq.s32.totalorder %s23, 1
      %p40 = por %p38, %p39
      %p41 = scmp.ne.s32.totalorder %s33, %s36
      %p42 = scmp.eq.s32.totalorder %s23, 0
      %p43 = por %p41, %p42
      %p44 = scmp.ne.s32.totalorder %s33, %s36
      %p45 = scmp.eq.s32.totalorder %s28, 1
      %p46 = por %p44, %p45
      %p47 = scmp.ne.s32.totalorder %s36, %s37
      %p48 = scmp.eq.s32.totalorder %s28, 0
      %p49 = por %p47, %p48
      %p50 = scmp.ne.s32.totalorder %s36, %s37
      %p51 = scmp.eq.s32.totalorder %s29, 1
      %p52 = por %p50, %p51
      %p54 = scmp.ne.s32.totalorder %s37, %s53
      %p55 = scmp.eq.s32.totalorder %s29, 0
      %p56 = por %p54, %p55
      %s58 = sadd.s32 %s57, 1
      %p61 = scmp.eq.s32.totalorder %s23, 1
      %p62 = scmp.ne.s32.totalorder %s57, %s59
      %p63 = scmp.eq.s32.totalorder %s23, 0
      %p64 = por %p62, %p63
      %p65 = scmp.ne.s32.totalorder %s57, %s59
      %p66 = scmp.eq.s32.totalorder %s28, 1
      %p67 = por %p65, %p66
      %p68 = scmp.ne.s32.totalorder %s59, %s60
      %p69 = scmp.eq.s32.totalorder %s28, 0
      %p70 = por %p68, %p69
      %p71 = scmp.ne.s32.totalorder %s59, %s60
      %p72 = scmp.eq.s32.totalorder %s29, 1
      %p73 = por %p71, %p72
      %p75 = scmp.ne.s32.totalorder %s60, %s74
      %p76 = scmp.eq.s32.totalorder %s29, 0
      %p77 = por %p75, %p76
      %s79 = sadd.s32 %s78, 1
      %p82 = scmp.eq.s32.totalorder %s23, 1
      %p83 = scmp.ne.s32.totalorder %s78, %s80
      %p84 = scmp.eq.s32.totalorder %s23, 0
      %p85 = por %p83, %p84
      %p86 = scmp.ne.s32.totalorder %s78, %s80
      %p87 = scmp.eq.s32.totalorder %s28, 1
      %p88 = por %p86, %p87
      %p89 = scmp.ne.s32.totalorder %s80, %s81
      %p90 = scmp.eq.s32.totalorder %s28, 0
      %p91 = por %p89, %p90
      %p92 = scmp.ne.s32.totalorder %s80, %s81
      %p93 = scmp.eq.s32.totalorder %s29, 1
      %p94 = por %p92, %p93
      %p96 = scmp.ne.s32.totalorder %s81, %s95
      %p97 = scmp.eq.s32.totalorder %s29, 0
      %p98 = por %p96, %p97
      %s100 = sadd.s32 %s99, 1
      %p103 = scmp.eq.s32.totalorder %s23, 1
      %p104 = scmp.ne.s32.totalorder %s99, %s101
      %p105 = scmp.eq.s32.totalorder %s23, 0
      %p106 = por %p104, %p105
      %p107 = scmp.ne.s32.totalorder %s99, %s101
      %p108 = scmp.eq.s32.totalorder %s28, 1
      %p109 = por %p107, %p108
      %p110 = scmp.ne.s32.totalorder %s101, %s102
      %p111 = scmp.eq.s32.totalorder %s28, 0
      %p112 = por %p110, %p111
      %p113 = scmp.ne.s32.totalorder %s101, %s102
      %p114 = scmp.eq.s32.totalorder %s29, 1
      %p115 = por %p113, %p114
      %p117 = scmp.ne.s32.totalorder %s102, %s116
      %p118 = scmp.eq.s32.totalorder %s29, 0
      %p119 = por %p117, %p118
      %s121 = sadd.s32 %s120, 1
      %p124 = scmp.eq.s32.totalorder %s23, 1
      %p125 = scmp.ne.s32.totalorder %s120, %s122
      %p126 = scmp.eq.s32.totalorder %s23, 0
      %p127 = por %p125, %p126
      %p128 = scmp.ne.s32.totalorder %s120, %s122
      %p129 = scmp.eq.s32.totalorder %s28, 1
      %p130 = por %p128, %p129
      %p131 = scmp.ne.s32.totalorder %s122, %s123
      %p132 = scmp.eq.s32.totalorder %s28, 0
      %p133 = por %p131, %p132
      %p134 = scmp.ne.s32.totalorder %s122, %s123
      %p135 = scmp.eq.s32.totalorder %s29, 1
      %p136 = por %p134, %p135
      %p138 = scmp.ne.s32.totalorder %s123, %s137
      %p139 = scmp.eq.s32.totalorder %s29, 0
      %p140 = por %p138, %p139
      %s142 = sadd.s32 %s141, 1
      %p145 = scmp.eq.s32.totalorder %s23, 1
      %p146 = scmp.ne.s32.totalorder %s141, %s143
      %p147 = scmp.eq.s32.totalorder %s23, 0
      %p148 = por %p146, %p147
      %p149 = scmp.ne.s32.totalorder %s141, %s143
      %p150 = scmp.eq.s32.totalorder %s28, 1
      %p151 = por %p149, %p150
      %p152 = scmp.ne.s32.totalorder %s143, %s144
      %p153 = scmp.eq.s32.totalorder %s28, 0
      %p154 = por %p152, %p153
      %p155 = scmp.ne.s32.totalorder %s143, %s144
      %p156 = scmp.eq.s32.totalorder %s29, 1
      %p157 = por %p155, %p156
      %p159 = scmp.ne.s32.totalorder %s144, %s158
      %p160 = scmp.eq.s32.totalorder %s29, 0
      %p161 = por %p159, %p160
      %s163 = sadd.s32 %s162, 1
      %p166 = scmp.eq.s32.totalorder %s23, 1
      %p167 = scmp.ne.s32.totalorder %s162, %s164
      %p168 = scmp.eq.s32.totalorder %s23, 0
      %p169 = por %p167, %p168
      %p170 = scmp.ne.s32.totalorder %s162, %s164
      %p171 = scmp.eq.s32.totalorder %s28, 1
      %p172 = por %p170, %p171
      %p173 = scmp.ne.s32.totalorder %s164, %s165
      %p174 = scmp.eq.s32.totalorder %s28, 0
      %p175 = por %p173, %p174
      %p176 = scmp.ne.s32.totalorder %s164, %s165
      %p177 = scmp.eq.s32.totalorder %s29, 1
      %p178 = por %p176, %p177
      %p180 = scmp.ne.s32.totalorder %s165, %s179
      %p181 = scmp.eq.s32.totalorder %s29, 0
      %p182 = por %p180, %p181
      %s184 = sadd.s32 %s183, 1
      %p187 = scmp.eq.s32.totalorder %s23, 1
      %p188 = scmp.ne.s32.totalorder %s183, %s185
      %p189 = scmp.eq.s32.totalorder %s23, 0
      %p190 = por %p188, %p189
      %p191 = scmp.ne.s32.totalorder %s183, %s185
      %p192 = scmp.eq.s32.totalorder %s28, 1
      %p193 = por %p191, %p192
      %p194 = scmp.ne.s32.totalorder %s185, %s186
      %p195 = scmp.eq.s32.totalorder %s28, 0
      %p196 = por %p194, %p195
      %p197 = scmp.ne.s32.totalorder %s185, %s186
      %p198 = scmp.eq.s32.totalorder %s29, 1
      %p199 = por %p197, %p198
      %p201 = scmp.ne.s32.totalorder %s186, %s200
      %p202 = scmp.eq.s32.totalorder %s29, 0
      %p203 = por %p201, %p202
      %s205 = sadd.s32 %s204, 1
      %p208 = scmp.eq.s32.totalorder %s23, 1
      %p209 = scmp.ne.s32.totalorder %s204, %s206
      %p210 = scmp.eq.s32.totalorder %s23, 0
      %p211 = por %p209, %p210
      %p212 = scmp.ne.s32.totalorder %s204, %s206
      %p213 = scmp.eq.s32.totalorder %s28, 1
      %p214 = por %p212, %p213
      %p215 = scmp.ne.s32.totalorder %s206, %s207
      %p216 = scmp.eq.s32.totalorder %s28, 0
      %p217 = por %p215, %p216
      %p218 = scmp.ne.s32.totalorder %s206, %s207
      %p219 = scmp.eq.s32.totalorder %s29, 1
      %p220 = por %p218, %p219
      %p222 = scmp.ne.s32.totalorder %s207, %s221
      %p223 = scmp.eq.s32.totalorder %s29, 0
      %p224 = por %p222, %p223
      %s226 = sadd.s32 %s225, 1
      %p229 = scmp.eq.s32.totalorder %s23, 1
      %p230 = scmp.ne.s32.totalorder %s225, %s227
      %p231 = scmp.eq.s32.totalorder %s23, 0
      %p232 = por %p230, %p231
      %p233 = scmp.ne.s32.totalorder %s225, %s227
      %p234 = scmp.eq.s32.totalorder %s28, 1
      %p235 = por %p233, %p234
      %p236 = scmp.ne.s32.totalorder %s227, %s228
      %p237 = scmp.eq.s32.totalorder %s28, 0
      %p238 = por %p236, %p237
      %p239 = scmp.ne.s32.totalorder %s227, %s228
      %p240 = scmp.eq.s32.totalorder %s29, 1
      %p241 = por %p239, %p240
      %p243 = scmp.ne.s32.totalorder %s228, %s242
      %p244 = scmp.eq.s32.totalorder %s29, 0
      %p245 = por %p243, %p244
      %s246 = ssub.s32 %s23, %s30
      %p247 = scmp.eq.s32.totalorder %s246, 0
      %s249 = sadd.s32 %s248, 1
      %s250 = scalar_select %p247, %s248, %s249
      %p253 = pneg %p247
      %p254 = scmp.eq.s32.totalorder %s23, 1
      %p255 = por %p253, %p254
      %p256 = scmp.ne.s32.totalorder %s248, %s251
      %p257 = scmp.eq.s32.totalorder %s23, 0
      %p258 = por %p256, %p257
      %p259 = scmp.ne.s32.totalorder %s248, %s251
      %p260 = scmp.eq.s32.totalorder %s28, 1
      %p261 = por %p259, %p260
      %p262 = scmp.ne.s32.totalorder %s251, %s252
      %p263 = scmp.eq.s32.totalorder %s28, 0
      %p264 = por %p262, %p263
      %p265 = scmp.ne.s32.totalorder %s251, %s252
      %p266 = scmp.eq.s32.totalorder %s29, 1
      %p267 = por %p265, %p266
      %p269 = scmp.ne.s32.totalorder %s252, %s268
      %p270 = scmp.eq.s32.totalorder %s29, 0
      %p271 = por %p269, %p270
      %p272 = scmp.le.s32.totalorder 1, %s23
      %p273 = scmp.lt.s32.totalorder %s23, 3
      %p274 = pnand %p272, %p273
      %p275 = pneg %p274
      // Predicated region
      $region9: #{tpu_custom_call.1} parent=5 // pred_check
        _
      $region10: #{tpu_custom_call.1} parent=5 // pred_check_branch
        %277 = sbr.rel (%p274) target = $region12
      $region11: #{tpu_custom_call.1} parent=5 // pred_region
        %s278 = ssub.s32 %s23, 1
        // Predicated region
        $region13: #{tpu_custom_call.1} parent=11 // pred_check
          %p279 = pneg %p70
        $region14: #{tpu_custom_call.1} parent=11 // pred_check_branch
          %281 = sbr.rel (%p279) target = $region16
        $region15: #{tpu_custom_call.1} parent=11 // pred_region
          %283 = vsyncadd [#allocation6], 0
          %s284 = sshll.u32 %s1, 4
          %s285 = int_to_ptr.hbm [resolvable:$true] %s284
          %s286 = sshll.u32 [#allocation5], 4
          %s287 = int_to_ptr.vmem [resolvable:$true] %s286
          %292 = dma.hbm_to_vmem [thread:$0]  %s285, 4608, %s287, [#allocation6], 256, 256, 16
        $region16: #{tpu_custom_call.1} parent=11 // pred_fallthru
          _
        // Predicated region
        $region17: #{tpu_custom_call.1} parent=11 // pred_check
          %p293 = pneg %p91
        $region18: #{tpu_custom_call.1} parent=11 // pred_check_branch
          %295 = sbr.rel (%p293) target = $region20
        $region19: #{tpu_custom_call.1} parent=11 // pred_region
          _
        $region20: #{tpu_custom_call.1} parent=11 // pred_fallthru
          _
        // Predicated region
        $region21: #{tpu_custom_call.1} parent=11 // pred_check
          %p296 = pneg %p112
        $region22: #{tpu_custom_call.1} parent=11 // pred_check_branch
          %298 = sbr.rel (%p296) target = $region24
        $region23: #{tpu_custom_call.1} parent=11 // pred_region
          _
        $region24: #{tpu_custom_call.1} parent=11 // pred_fallthru
          _
        // Predicated region
        $region25: #{tpu_custom_call.1} parent=11 // pred_check
          %p299 = pneg %p133
        $region26: #{tpu_custom_call.1} parent=11 // pred_check_branch
          %301 = sbr.rel (%p299) target = $region28
        $region27: #{tpu_custom_call.1} parent=11 // pred_region
          %303 = vsyncadd [#allocation6], 0
          %s304 = sshll.u32 %s4, 4
          %s305 = int_to_ptr.hbm [resolvable:$true] %s304
          %s306 = sshll.u32 [#allocation7], 4
          %s307 = int_to_ptr.vmem [resolvable:$true] %s306
          %312 = dma.hbm_to_vmem [thread:$0]  %s305, 512, %s307, [#allocation6], 256, 256, 16
        $region28: #{tpu_custom_call.1} parent=11 // pred_fallthru
          _
        // Predicated region
        $region29: #{tpu_custom_call.1} parent=11 // pred_check
          %p313 = pneg %p154
        $region30: #{tpu_custom_call.1} parent=11 // pred_check_branch
          %315 = sbr.rel (%p313) target = $region32
        $region31: #{tpu_custom_call.1} parent=11 // pred_region
          _
        $region32: #{tpu_custom_call.1} parent=11 // pred_fallthru
          _
        // Predicated region
        $region33: #{tpu_custom_call.1} parent=11 // pred_check
          %p316 = pneg %p175
        $region34: #{tpu_custom_call.1} parent=11 // pred_check_branch
          %318 = sbr.rel (%p316) target = $region36
        $region35: #{tpu_custom_call.1} parent=11 // pred_region
          _
        $region36: #{tpu_custom_call.1} parent=11 // pred_fallthru
          _
        // Predicated region
        $region37: #{tpu_custom_call.1} parent=11 // pred_check
          %p319 = pneg %p196
        $region38: #{tpu_custom_call.1} parent=11 // pred_check_branch
          %321 = sbr.rel (%p319) target = $region40
        $region39: #{tpu_custom_call.1} parent=11 // pred_region
          _
        $region40: #{tpu_custom_call.1} parent=11 // pred_fallthru
          _
        // Predicated region
        $region41: #{tpu_custom_call.1} parent=11 // pred_check
          %p322 = pneg %p217
        $region42: #{tpu_custom_call.1} parent=11 // pred_check_branch
          %324 = sbr.rel (%p322) target = $region44
        $region43: #{tpu_custom_call.1} parent=11 // pred_region
          _
        $region44: #{tpu_custom_call.1} parent=11 // pred_fallthru
          _
        // Predicated region
        $region45: #{tpu_custom_call.1} parent=11 // pred_check
          %p325 = pneg %p238
        $region46: #{tpu_custom_call.1} parent=11 // pred_check_branch
          %327 = sbr.rel (%p325) target = $region48
        $region47: #{tpu_custom_call.1} parent=11 // pred_region
          _
        $region48: #{tpu_custom_call.1} parent=11 // pred_fallthru
          _
      $region12: #{tpu_custom_call.1} parent=5 // pred_fallthru
        _
      %p328 = scmp.lt.s32.totalorder %s23, 2
      // Predicated region
      $region49: #{tpu_custom_call.1} parent=5 // pred_check
        %p329 = pneg %p328
      $region50: #{tpu_custom_call.1} parent=5 // pred_check_branch
        %331 = sbr.rel (%p329) target = $region52
      $region51: #{tpu_custom_call.1} parent=5 // pred_region
        // Predicated region
        $region53: #{tpu_custom_call.1} parent=51 // pred_check
          %p332 = pneg %p43
        $region54: #{tpu_custom_call.1} parent=51 // pred_check_branch
          %334 = sbr.rel (%p332) target = $region56
        $region55: #{tpu_custom_call.1} parent=51 // pred_region
          %s335 = sand.u32 %s33, 1
          %s336 = scalar_lea.sflag [#allocation3], %s335
          %s337 = sand.u32 %s33, 1
          %s338 = smul.addr %s337, 32
          %s339 = scalar_lea.vmem [#allocation2], %s338
          %341 = vsyncadd %s336, 0
          %s342 = smul.addr %s23, 4
          %s343 = smul.addr %s342, 8
          %s344 = scalar_lea.hbm %s0, %s343
          %s345 = sshll.u32 %s344, 4
          %s346 = int_to_ptr.hbm [resolvable:$true] %s345
          %s347 = sshll.u32 %s339, 4
          %s348 = int_to_ptr.vmem [resolvable:$true] %s347
          %353 = dma.hbm_to_vmem [thread:$0]  %s346, 512, %s348, %s336, 256, 256, 16
        $region56: #{tpu_custom_call.1} parent=51 // pred_fallthru
          _
      $region52: #{tpu_custom_call.1} parent=5 // pred_fallthru
        _
      %p354 = scmp.le.s32.totalorder 1, %s23
      %p355 = scmp.lt.s32.totalorder %s23, 3
      %p356 = pnand %p354, %p355
      %p357 = pneg %p356
      // Predicated region
      $region57: #{tpu_custom_call.1} parent=5 // pred_check
        _
      $region58: #{tpu_custom_call.1} parent=5 // pred_check_branch
        %359 = sbr.rel (%p356) target = $region60
      $region59: #{tpu_custom_call.1} parent=5 // pred_region
        %s360 = ssub.s32 %s23, 1
        %s361 = sand.u32 %s36, 1
        %s362 = scalar_lea.sflag [#allocation3], %s361
        %s363 = sand.u32 %s36, 1
        %s364 = smul.addr %s363, 32
        %s365 = scalar_lea.vmem [#allocation2], %s364
        // Predicated region
        $region61: #{tpu_custom_call.1} parent=59 // pred_check
          %p366 = pneg %p49
        $region62: #{tpu_custom_call.1} parent=59 // pred_check_branch
          %368 = sbr.rel (%p366) target = $region64
        $region63: #{tpu_custom_call.1} parent=59 // pred_region
          %370 = dma.done %s362, 512
        $region64: #{tpu_custom_call.1} parent=59 // pred_fallthru
          _
        // Predicated region
        $region65: #{tpu_custom_call.1} parent=59 // pred_check
          %p371 = pneg %p70
        $region66: #{tpu_custom_call.1} parent=59 // pred_check_branch
          %373 = sbr.rel (%p371) target = $region68
        $region67: #{tpu_custom_call.1} parent=59 // pred_region
          %375 = dma.done [#allocation6], 4608
        $region68: #{tpu_custom_call.1} parent=59 // pred_fallthru
          _
        // Predicated region
        $region69: #{tpu_custom_call.1} parent=59 // pred_check
          %p376 = pneg %p133
        $region70: #{tpu_custom_call.1} parent=59 // pred_check_branch
          %378 = sbr.rel (%p376) target = $region72
        $region71: #{tpu_custom_call.1} parent=59 // pred_region
          %380 = dma.done [#allocation6], 512
        $region72: #{tpu_custom_call.1} parent=59 // pred_fallthru
          _
        %s381 = sand.u32 %s36, 1
        %s382 = scalar_lea.sflag [#allocation3], %s381
        %s383 = sand.u32 %s36, 1
        %s384 = smul.addr %s383, 32
        %s385 = scalar_lea.vmem [#allocation2], %s384
        %p386 = pneg %p49
        %p387 = pneg %p46
        %p388 = pneg %p70
        %p389 = pneg %p67
        %p390 = pneg %p91
        %p391 = pneg %p88
        %p392 = pneg %p112
        %p393 = pneg %p109
        %p394 = pneg %p133
        %p395 = pneg %p130
        %p396 = pneg %p154
        %p397 = pneg %p151
        %p398 = pneg %p175
        %p399 = pneg %p172
        %p400 = pneg %p196
        %p401 = pneg %p193
        %p402 = pneg %p217
        %p403 = pneg %p214
        %p404 = pneg %p238
        %p405 = pneg %p235
        %p406 = pneg %p264
        %p407 = pneg %p261
        %s408 = sand.u32 %s251, 1
        %s409 = scalar_lea.sflag [#allocation4], %s408
        %s410 = sand.u32 %s251, 1
        %s411 = smul.addr %s410, 32
        %s412 = scalar_lea.vmem [#allocation8], %s411
        %v413 = vld [vmem:[%s365] sm:$0xff]
        %v414 = vld [vmem:[%s365 + $0x8] sm:$0xff]
        %v415 = vld [vmem:[%s365 + $0x10] sm:$0xff]
        %v416 = vld [vmem:[%s365 + $0x18] sm:$0xff]
        %v417 = vld [vmem:[#allocation5] sm:$0xff]
        %v418 = vld [vmem:[#allocation5 + $0x8] sm:$0xff]
        %v419 = vld [vmem:[#allocation5 + $0x10] sm:$0xff]
        %v420 = vld [vmem:[#allocation5 + $0x18] sm:$0xff]
        %v421 = vld [vmem:[#allocation5 + $0x20] sm:$0xff]
        %v422 = vld [vmem:[#allocation5 + $0x28] sm:$0xff]
        %v423 = vld [vmem:[#allocation5 + $0x30] sm:$0xff]
        %v424 = vld [vmem:[#allocation5 + $0x38] sm:$0xff]
        %v425 = vld [vmem:[#allocation5 + $0x40] sm:$0xff]
        %v426 = vld [vmem:[#allocation5 + $0x48] sm:$0xff]
        %v427 = vld [vmem:[#allocation5 + $0x50] sm:$0xff]
        %v428 = vld [vmem:[#allocation5 + $0x58] sm:$0xff]
        %v429 = vld [vmem:[#allocation5 + $0x60] sm:$0xff]
        %v430 = vld [vmem:[#allocation5 + $0x68] sm:$0xff]
        %v431 = vld [vmem:[#allocation5 + $0x70] sm:$0xff]
        %v432 = vld [vmem:[#allocation5 + $0x78] sm:$0xff]
        %v433 = vld [vmem:[#allocation5 + $0x80] sm:$0xff]
        %v434 = vld [vmem:[#allocation5 + $0x88] sm:$0xff]
        %v435 = vld [vmem:[#allocation5 + $0x90] sm:$0xff]
        %v436 = vld [vmem:[#allocation5 + $0x98] sm:$0xff]
        %v437 = vld [vmem:[#allocation5 + $0xa0] sm:$0xff]
        %v438 = vld [vmem:[#allocation5 + $0xa8] sm:$0xff]
        %v439 = vld [vmem:[#allocation5 + $0xb0] sm:$0xff]
        %v440 = vld [vmem:[#allocation5 + $0xb8] sm:$0xff]
        %v441 = vld [vmem:[#allocation5 + $0xc0] sm:$0xff]
        %v442 = vld [vmem:[#allocation5 + $0xc8] sm:$0xff]
        %v443 = vld [vmem:[#allocation5 + $0xd0] sm:$0xff]
        %v444 = vld [vmem:[#allocation5 + $0xd8] sm:$0xff]
        %v445 = vld [vmem:[#allocation5 + $0xe0] sm:$0xff]
        %v446 = vld [vmem:[#allocation5 + $0xe8] sm:$0xff]
        %v447 = vld [vmem:[#allocation5 + $0xf0] sm:$0xff]
        %v448 = vld [vmem:[#allocation5 + $0xf8] sm:$0xff]
        %v449 = vld [vmem:[#allocation5 + $0x100] sm:$0xff]
        %v450 = vld [vmem:[#allocation5 + $0x108] sm:$0xff]
        %v451 = vld [vmem:[#allocation5 + $0x110] sm:$0xff]
        %v452 = vld [vmem:[#allocation5 + $0x118] sm:$0xff]
        %453 = vrot.lane.b32.xlu0 %v413, 17
        %v454 = vpop.permute.xlu0 %453
        %455 = vrot.lane.b32.xlu0 %v415, 17
        %v456 = vpop.permute.xlu0 %455
        %457 = vrot.lane.b32.xlu0 %v414, 17
        %v458 = vpop.permute.xlu0 %457
        %459 = vrot.lane.b32.xlu0 %v416, 17
        %v460 = vpop.permute.xlu0 %459
        %v461 = vlaneseq
        %v462 = vand.u32 %v461, 127
        %vm463 = vcmp.lt.s32.totalorder %v462, 17
        %v464 = vsel %vm463, %v454, %v458
        %v465 = vsel %vm463, %v456, %v460
        %v466 = vsel %vm463, %v458, %v454
        %v467 = vsel %vm463, %v460, %v456
        %468 = vrot.lane.b32.xlu0 %v413, 16
        %v469 = vpop.permute.xlu0 %468
        %470 = vrot.lane.b32.xlu0 %v415, 16
        %v471 = vpop.permute.xlu0 %470
        %472 = vrot.lane.b32.xlu0 %v414, 16
        %v473 = vpop.permute.xlu0 %472
        %474 = vrot.lane.b32.xlu0 %v416, 16
        %v475 = vpop.permute.xlu0 %474
        %vm476 = vcmp.lt.s32.totalorder %v462, 16
        %v477 = vsel %vm476, %v469, %v473
        %v478 = vsel %vm476, %v471, %v475
        %v479 = vsel %vm476, %v473, %v469
        %v480 = vsel %vm476, %v475, %v471
        %481 = vrot.lane.b32.xlu0 %v413, 15
        %v482 = vpop.permute.xlu0 %481
        %483 = vrot.lane.b32.xlu0 %v415, 15
        %v484 = vpop.permute.xlu0 %483
        %485 = vrot.lane.b32.xlu0 %v414, 15
        %v486 = vpop.permute.xlu0 %485
        %487 = vrot.lane.b32.xlu0 %v416, 15
        %v488 = vpop.permute.xlu0 %487
        %vm489 = vcmp.lt.s32.totalorder %v462, 15
        %v490 = vsel %vm489, %v482, %v486
        %v491 = vsel %vm489, %v484, %v488
        %v492 = vsel %vm489, %v486, %v482
        %v493 = vsel %vm489, %v488, %v484
        %494 = vrot.lane.b32.xlu0 %v413, 1
        %v495 = vpop.permute.xlu0 %494
        %496 = vrot.lane.b32.xlu0 %v415, 1
        %v497 = vpop.permute.xlu0 %496
        %498 = vrot.lane.b32.xlu0 %v414, 1
        %v499 = vpop.permute.xlu0 %498
        %500 = vrot.lane.b32.xlu0 %v416, 1
        %v501 = vpop.permute.xlu0 %500
        %vm502 = vcmp.lt.s32.totalorder %v462, 1
        %v503 = vsel %vm502, %v495, %v499
        %v504 = vsel %vm502, %v497, %v501
        %v505 = vsel %vm502, %v499, %v495
        %v506 = vsel %vm502, %v501, %v497
        %507 = vrot.lane.b32.xlu0 %v413, 127
        %v508 = vpop.permute.xlu0 %507
        %509 = vrot.lane.b32.xlu0 %v415, 127
        %v510 = vpop.permute.xlu0 %509
        %511 = vrot.lane.b32.xlu0 %v414, 127
        %v512 = vpop.permute.xlu0 %511
        %513 = vrot.lane.b32.xlu0 %v416, 127
        %v514 = vpop.permute.xlu0 %513
        %vm515 = vcmp.lt.s32.totalorder %v462, 127
        %v516 = vsel %vm515, %v508, %v512
        %v517 = vsel %vm515, %v510, %v514
        %v518 = vsel %vm515, %v512, %v508
        %v519 = vsel %vm515, %v514, %v510
        %520 = vrot.lane.b32.xlu0 %v413, 113
        %v521 = vpop.permute.xlu0 %520
        %522 = vrot.lane.b32.xlu0 %v415, 113
        %v523 = vpop.permute.xlu0 %522
        %524 = vrot.lane.b32.xlu0 %v414, 113
        %v525 = vpop.permute.xlu0 %524
        %526 = vrot.lane.b32.xlu0 %v416, 113
        %v527 = vpop.permute.xlu0 %526
        %vm528 = vcmp.lt.s32.totalorder %v462, 113
        %v529 = vsel %vm528, %v521, %v525
        %v530 = vsel %vm528, %v523, %v527
        %v531 = vsel %vm528, %v525, %v521
        %v532 = vsel %vm528, %v527, %v523
        %533 = vrot.lane.b32.xlu0 %v413, 112
        %v534 = vpop.permute.xlu0 %533
        %535 = vrot.lane.b32.xlu0 %v415, 112
        %v536 = vpop.permute.xlu0 %535
        %537 = vrot.lane.b32.xlu0 %v414, 112
        %v538 = vpop.permute.xlu0 %537
        %539 = vrot.lane.b32.xlu0 %v416, 112
        %v540 = vpop.permute.xlu0 %539
        %vm541 = vcmp.lt.s32.totalorder %v462, 112
        %v542 = vsel %vm541, %v534, %v538
        %v543 = vsel %vm541, %v536, %v540
        %v544 = vsel %vm541, %v538, %v534
        %v545 = vsel %vm541, %v540, %v536
        %546 = vrot.lane.b32.xlu0 %v413, 111
        %v547 = vpop.permute.xlu0 %546
        %548 = vrot.lane.b32.xlu0 %v415, 111
        %v549 = vpop.permute.xlu0 %548
        %550 = vrot.lane.b32.xlu0 %v414, 111
        %v551 = vpop.permute.xlu0 %550
        %552 = vrot.lane.b32.xlu0 %v416, 111
        %v553 = vpop.permute.xlu0 %552
        %vm554 = vcmp.lt.s32.totalorder %v462, 111
        %v555 = vsel %vm554, %v547, %v551
        %v556 = vsel %vm554, %v549, %v553
        %v557 = vsel %vm554, %v551, %v547
        %v558 = vsel %vm554, %v553, %v549
        %v559 = vmul.f32 %v466, %v417
        %v560 = vmul.f32 %v464, %v418
        %v561 = vmul.f32 %v467, %v419
        %v562 = vmul.f32 %v465, %v420
        %v563 = vmul.f32 %v479, %v421
        %v564 = vmul.f32 %v477, %v422
        %v565 = vmul.f32 %v480, %v423
        %v566 = vmul.f32 %v478, %v424
        %v567 = vmul.f32 %v492, %v425
        %v568 = vmul.f32 %v490, %v426
        %v569 = vmul.f32 %v493, %v427
        %v570 = vmul.f32 %v491, %v428
        %v571 = vmul.f32 %v505, %v429
        %v572 = vmul.f32 %v503, %v430
        %v573 = vmul.f32 %v506, %v431
        %v574 = vmul.f32 %v504, %v432
        %v575 = vmul.f32 %v413, %v433
        %v576 = vmul.f32 %v414, %v434
        %v577 = vmul.f32 %v415, %v435
        %v578 = vmul.f32 %v416, %v436
        %v579 = vmul.f32 %v516, %v437
        %v580 = vmul.f32 %v518, %v438
        %v581 = vmul.f32 %v517, %v439
        %v582 = vmul.f32 %v519, %v440
        %v583 = vmul.f32 %v529, %v441
        %v584 = vmul.f32 %v531, %v442
        %v585 = vmul.f32 %v530, %v443
        %v586 = vmul.f32 %v532, %v444
        %v587 = vmul.f32 %v542, %v445
        %v588 = vmul.f32 %v544, %v446
        %v589 = vmul.f32 %v543, %v447
        %v590 = vmul.f32 %v545, %v448
        %v591 = vmul.f32 %v555, %v449
        %v592 = vmul.f32 %v557, %v450
        %v593 = vmul.f32 %v556, %v451
        %v594 = vmul.f32 %v558, %v452
        %v595 = vld [vmem:[%s2] sm:$0xff]
        %v596 = vld [vmem:[%s2 + $0x8] sm:$0xff]
        %v597 = vld [vmem:[%s2 + $0x10] sm:$0xff]
        %v598 = vld [vmem:[%s2 + $0x18] sm:$0xff]
        %v599 = vld [vmem:[%s3] sm:$0xff]
        %v600 = vld [vmem:[%s3 + $0x8] sm:$0xff]
        %602 = vset.pattern.permute.xlu0 0
        %603 = vperm.xlu0 %602, %v599
        %v604 = vpop.permute.xlu0 %603
        %607 = vset.pattern.permute.xlu0 0
        %608 = vperm.xlu0 %607, %v600
        %v609 = vpop.permute.xlu0 %608
        %vm611 = vcmask 130048
        %v613 = vsel %vm611, %v596, 0
        %v616 = vsel %vm611, %v598, 0
        %618 = vmatpush.msra.mxu0 %v589
        %619 = vmatpush.msra.mxu0 %v587
        %620 = vmatpush.msra.mxu0 %v585
        %621 = vmatpush.msra.mxu0 %v583
        %622 = vmatpush.msra.mxu0 %v581
        %623 = vmatpush.msra.mxu0 %v579
        %624 = vmatpush.msra.mxu0 %v577
        %625 = vmatpush.msra.mxu0 %v575
        %626 = vmatpush.msra.mxu0 %v573
        %627 = vmatpush.msra.mxu0 %v571
        %628 = vmatpush.msra.mxu0 %v569
        %629 = vmatpush.msra.mxu0 %v567
        %630 = vmatpush.msra.mxu0 %v565
        %631 = vmatpush.msra.mxu0 %v563
        %632 = vmatpush.msra.mxu0 %v561
        %633 = vmatpush.msra.mxu0 %v559
        %634 = vmatmul.f32.gmra.mxu0 %v595
        %v635 = vpop.f32.mrf.mxu0
        %v636 = vadd.f32 %v604, %v635
        %637 = vmatmul.f32.gmra.mxu0 %v597
        %v638 = vpop.f32.mrf.mxu0
        %v639 = vadd.f32 %v609, %v638
        %640 = vdwg.mxu0
        %641 = vmatpush.msra.mxu0 0.0
        %642 = vmatpush.msra.mxu0 0.0
        %643 = vmatpush.msra.mxu0 0.0
        %644 = vmatpush.msra.mxu0 0.0
        %645 = vmatpush.msra.mxu0 0.0
        %646 = vmatpush.msra.mxu0 0.0
        %647 = vmatpush.msra.mxu0 0.0
        %648 = vmatpush.msra.mxu0 0.0
        %649 = vmatpush.msra.mxu0 0.0
        %650 = vmatpush.msra.mxu0 0.0
        %651 = vmatpush.msra.mxu0 0.0
        %652 = vmatpush.msra.mxu0 0.0
        %653 = vmatpush.msra.mxu0 0.0
        %654 = vmatpush.msra.mxu0 0.0
        %655 = vmatpush.msra.mxu0 %v593
        %656 = vmatpush.msra.mxu0 %v591
        %657 = vmatmul.f32.gmra.mxu0 %v613
        %v658 = vpop.f32.mrf.mxu0
        %v659 = vadd.f32 %v636, %v658
        %660 = vmatmul.f32.gmra.mxu0 %v616
        %v661 = vpop.f32.mrf.mxu0
        %v662 = vadd.f32 %v639, %v661
        %663 = vdwg.mxu0
        %664 = vmatpush.msra.mxu0 %v590
        %665 = vmatpush.msra.mxu0 %v588
        %666 = vmatpush.msra.mxu0 %v586
        %667 = vmatpush.msra.mxu0 %v584
        %668 = vmatpush.msra.mxu0 %v582
        %669 = vmatpush.msra.mxu0 %v580
        %670 = vmatpush.msra.mxu0 %v578
        %671 = vmatpush.msra.mxu0 %v576
        %672 = vmatpush.msra.mxu0 %v574
        %673 = vmatpush.msra.mxu0 %v572
        %674 = vmatpush.msra.mxu0 %v570
        %675 = vmatpush.msra.mxu0 %v568
        %676 = vmatpush.msra.mxu0 %v566
        %677 = vmatpush.msra.mxu0 %v564
        %678 = vmatpush.msra.mxu0 %v562
        %679 = vmatpush.msra.mxu0 %v560
        %680 = vmatmul.f32.gmra.mxu0 %v595
        %v681 = vpop.f32.mrf.mxu0
        %v682 = vadd.f32 %v604, %v681
        %683 = vmatmul.f32.gmra.mxu0 %v597
        %v684 = vpop.f32.mrf.mxu0
        %v685 = vadd.f32 %v609, %v684
        %686 = vdwg.mxu0
        %687 = vmatpush.msra.mxu0 0.0
        %688 = vmatpush.msra.mxu0 0.0
        %689 = vmatpush.msra.mxu0 0.0
        %690 = vmatpush.msra.mxu0 0.0
        %691 = vmatpush.msra.mxu0 0.0
        %692 = vmatpush.msra.mxu0 0.0
        %693 = vmatpush.msra.mxu0 0.0
        %694 = vmatpush.msra.mxu0 0.0
        %695 = vmatpush.msra.mxu0 0.0
        %696 = vmatpush.msra.mxu0 0.0
        %697 = vmatpush.msra.mxu0 0.0
        %698 = vmatpush.msra.mxu0 0.0
        %699 = vmatpush.msra.mxu0 0.0
        %700 = vmatpush.msra.mxu0 0.0
        %701 = vmatpush.msra.mxu0 %v594
        %702 = vmatpush.msra.mxu0 %v592
        %703 = vmatmul.f32.gmra.mxu0 %v613
        %v704 = vpop.f32.mrf.mxu0
        %v705 = vadd.f32 %v682, %v704
        %706 = vmatmul.f32.gmra.mxu0 %v616
        %v707 = vpop.f32.mrf.mxu0
        %v708 = vadd.f32 %v685, %v707
        %709 = vdwg.mxu0
        %v710 = vmax.f32 %v659, 0.0
        %v711 = vmax.f32 %v705, 0.0
        %v712 = vmax.f32 %v662, 0.0
        %v713 = vmax.f32 %v708, 0.0
        %714 = vrot.lane.b32.xlu0 %v710, 17
        %v715 = vpop.permute.xlu0 %714
        %716 = vrot.lane.b32.xlu0 %v712, 17
        %v717 = vpop.permute.xlu0 %716
        %718 = vrot.lane.b32.xlu0 %v711, 17
        %v719 = vpop.permute.xlu0 %718
        %720 = vrot.lane.b32.xlu0 %v713, 17
        %v721 = vpop.permute.xlu0 %720
        %v722 = vsel %vm463, %v715, %v719
        %v723 = vsel %vm463, %v717, %v721
        %v724 = vsel %vm463, %v719, %v715
        %v725 = vsel %vm463, %v721, %v717
        %726 = vrot.lane.b32.xlu0 %v710, 16
        %v727 = vpop.permute.xlu0 %726
        %728 = vrot.lane.b32.xlu0 %v712, 16
        %v729 = vpop.permute.xlu0 %728
        %730 = vrot.lane.b32.xlu0 %v711, 16
        %v731 = vpop.permute.xlu0 %730
        %732 = vrot.lane.b32.xlu0 %v713, 16
        %v733 = vpop.permute.xlu0 %732
        %v734 = vsel %vm476, %v727, %v731
        %v735 = vsel %vm476, %v729, %v733
        %v736 = vsel %vm476, %v731, %v727
        %v737 = vsel %vm476, %v733, %v729
        %738 = vrot.lane.b32.xlu0 %v710, 15
        %v739 = vpop.permute.xlu0 %738
        %740 = vrot.lane.b32.xlu0 %v712, 15
        %v741 = vpop.permute.xlu0 %740
        %742 = vrot.lane.b32.xlu0 %v711, 15
        %v743 = vpop.permute.xlu0 %742
        %744 = vrot.lane.b32.xlu0 %v713, 15
        %v745 = vpop.permute.xlu0 %744
        %v746 = vsel %vm489, %v739, %v743
        %v747 = vsel %vm489, %v741, %v745
        %v748 = vsel %vm489, %v743, %v739
        %v749 = vsel %vm489, %v745, %v741
        %750 = vrot.lane.b32.xlu0 %v710, 1
        %v751 = vpop.permute.xlu0 %750
        %752 = vrot.lane.b32.xlu0 %v712, 1
        %v753 = vpop.permute.xlu0 %752
        %754 = vrot.lane.b32.xlu0 %v711, 1
        %v755 = vpop.permute.xlu0 %754
        %756 = vrot.lane.b32.xlu0 %v713, 1
        %v757 = vpop.permute.xlu0 %756
        %v758 = vsel %vm502, %v751, %v755
        %v759 = vsel %vm502, %v753, %v757
        %v760 = vsel %vm502, %v755, %v751
        %v761 = vsel %vm502, %v757, %v753
        %762 = vrot.lane.b32.xlu0 %v710, 127
        %v763 = vpop.permute.xlu0 %762
        %764 = vrot.lane.b32.xlu0 %v712, 127
        %v765 = vpop.permute.xlu0 %764
        %766 = vrot.lane.b32.xlu0 %v711, 127
        %v767 = vpop.permute.xlu0 %766
        %768 = vrot.lane.b32.xlu0 %v713, 127
        %v769 = vpop.permute.xlu0 %768
        %v770 = vsel %vm515, %v763, %v767
        %v771 = vsel %vm515, %v765, %v769
        %v772 = vsel %vm515, %v767, %v763
        %v773 = vsel %vm515, %v769, %v765
        %774 = vrot.lane.b32.xlu0 %v710, 113
        %v775 = vpop.permute.xlu0 %774
        %776 = vrot.lane.b32.xlu0 %v712, 113
        %v777 = vpop.permute.xlu0 %776
        %778 = vrot.lane.b32.xlu0 %v711, 113
        %v779 = vpop.permute.xlu0 %778
        %780 = vrot.lane.b32.xlu0 %v713, 113
        %v781 = vpop.permute.xlu0 %780
        %v782 = vsel %vm528, %v775, %v779
        %v783 = vsel %vm528, %v777, %v781
        %v784 = vsel %vm528, %v779, %v775
        %v785 = vsel %vm528, %v781, %v777
        %786 = vrot.lane.b32.xlu0 %v710, 112
        %v787 = vpop.permute.xlu0 %786
        %788 = vrot.lane.b32.xlu0 %v712, 112
        %v789 = vpop.permute.xlu0 %788
        %790 = vrot.lane.b32.xlu0 %v711, 112
        %v791 = vpop.permute.xlu0 %790
        %792 = vrot.lane.b32.xlu0 %v713, 112
        %v793 = vpop.permute.xlu0 %792
        %v794 = vsel %vm541, %v787, %v791
        %v795 = vsel %vm541, %v789, %v793
        %v796 = vsel %vm541, %v791, %v787
        %v797 = vsel %vm541, %v793, %v789
        %798 = vrot.lane.b32.xlu0 %v710, 111
        %v799 = vpop.permute.xlu0 %798
        %800 = vrot.lane.b32.xlu0 %v712, 111
        %v801 = vpop.permute.xlu0 %800
        %802 = vrot.lane.b32.xlu0 %v711, 111
        %v803 = vpop.permute.xlu0 %802
        %804 = vrot.lane.b32.xlu0 %v713, 111
        %v805 = vpop.permute.xlu0 %804
        %v806 = vsel %vm554, %v799, %v803
        %v807 = vsel %vm554, %v801, %v805
        %v808 = vsel %vm554, %v803, %v799
        %v809 = vsel %vm554, %v805, %v801
        %v810 = vmul.f32 %v724, %v417
        %v811 = vmul.f32 %v722, %v418
        %v812 = vmul.f32 %v725, %v419
        %v813 = vmul.f32 %v723, %v420
        %v814 = vmul.f32 %v736, %v421
        %v815 = vmul.f32 %v734, %v422
        %v816 = vmul.f32 %v737, %v423
        %v817 = vmul.f32 %v735, %v424
        %v818 = vmul.f32 %v748, %v425
        %v819 = vmul.f32 %v746, %v426
        %v820 = vmul.f32 %v749, %v427
        %v821 = vmul.f32 %v747, %v428
        %v822 = vmul.f32 %v760, %v429
        %v823 = vmul.f32 %v758, %v430
        %v824 = vmul.f32 %v761, %v431
        %v825 = vmul.f32 %v759, %v432
        %v826 = vmul.f32 %v710, %v433
        %v827 = vmul.f32 %v711, %v434
        %v828 = vmul.f32 %v712, %v435
        %v829 = vmul.f32 %v713, %v436
        %v830 = vmul.f32 %v770, %v437
        %v831 = vmul.f32 %v772, %v438
        %v832 = vmul.f32 %v771, %v439
        %v833 = vmul.f32 %v773, %v440
        %v834 = vmul.f32 %v782, %v441
        %v835 = vmul.f32 %v784, %v442
        %v836 = vmul.f32 %v783, %v443
        %v837 = vmul.f32 %v785, %v444
        %v838 = vmul.f32 %v794, %v445
        %v839 = vmul.f32 %v796, %v446
        %v840 = vmul.f32 %v795, %v447
        %v841 = vmul.f32 %v797, %v448
        %v842 = vmul.f32 %v806, %v449
        %v843 = vmul.f32 %v808, %v450
        %v844 = vmul.f32 %v807, %v451
        %v845 = vmul.f32 %v809, %v452
        %v846 = vld [vmem:[#allocation7] sm:$0xff]
        %v847 = vld [vmem:[#allocation7 + $0x8] sm:$0xff]
        %v848 = vld [vmem:[#allocation7 + $0x10] sm:$0xff]
        %v849 = vld [vmem:[#allocation7 + $0x18] sm:$0xff]
        %v850 = vld [vmem:[%s5] sm:$0xff]
        %v851 = vld [vmem:[%s5 + $0x8] sm:$0xff]
        %853 = vset.pattern.permute.xlu0 0
        %854 = vperm.xlu0 %853, %v850
        %v855 = vpop.permute.xlu0 %854
        %858 = vset.pattern.permute.xlu0 0
        %859 = vperm.xlu0 %858, %v851
        %v860 = vpop.permute.xlu0 %859
        %v863 = vsel %vm611, %v847, 0
        %v866 = vsel %vm611, %v849, 0
        %868 = vmatpush.msra.mxu0 %v840
        %869 = vmatpush.msra.mxu0 %v838
        %870 = vmatpush.msra.mxu0 %v836
        %871 = vmatpush.msra.mxu0 %v834
        %872 = vmatpush.msra.mxu0 %v832
        %873 = vmatpush.msra.mxu0 %v830
        %874 = vmatpush.msra.mxu0 %v828
        %875 = vmatpush.msra.mxu0 %v826
        %876 = vmatpush.msra.mxu0 %v824
        %877 = vmatpush.msra.mxu0 %v822
        %878 = vmatpush.msra.mxu0 %v820
        %879 = vmatpush.msra.mxu0 %v818
        %880 = vmatpush.msra.mxu0 %v816
        %881 = vmatpush.msra.mxu0 %v814
        %882 = vmatpush.msra.mxu0 %v812
        %883 = vmatpush.msra.mxu0 %v810
        %884 = vmatmul.f32.gmra.mxu0 %v846
        %v885 = vpop.f32.mrf.mxu0
        %v886 = vadd.f32 %v855, %v885
        %887 = vmatmul.f32.gmra.mxu0 %v848
        %v888 = vpop.f32.mrf.mxu0
        %v889 = vadd.f32 %v860, %v888
        %890 = vdwg.mxu0
        %891 = vmatpush.msra.mxu0 0.0
        %892 = vmatpush.msra.mxu0 0.0
        %893 = vmatpush.msra.mxu0 0.0
        %894 = vmatpush.msra.mxu0 0.0
        %895 = vmatpush.msra.mxu0 0.0
        %896 = vmatpush.msra.mxu0 0.0
        %897 = vmatpush.msra.mxu0 0.0
        %898 = vmatpush.msra.mxu0 0.0
        %899 = vmatpush.msra.mxu0 0.0
        %900 = vmatpush.msra.mxu0 0.0
        %901 = vmatpush.msra.mxu0 0.0
        %902 = vmatpush.msra.mxu0 0.0
        %903 = vmatpush.msra.mxu0 0.0
        %904 = vmatpush.msra.mxu0 0.0
        %905 = vmatpush.msra.mxu0 %v844
        %906 = vmatpush.msra.mxu0 %v842
        %907 = vmatmul.f32.gmra.mxu0 %v863
        %v908 = vpop.f32.mrf.mxu0
        %v909 = vadd.f32 %v886, %v908
        %910 = vmatmul.f32.gmra.mxu0 %v866
        %v911 = vpop.f32.mrf.mxu0
        %v912 = vadd.f32 %v889, %v911
        %913 = vdwg.mxu0
        %914 = vmatpush.msra.mxu0 %v841
        %915 = vmatpush.msra.mxu0 %v839
        %916 = vmatpush.msra.mxu0 %v837
        %917 = vmatpush.msra.mxu0 %v835
        %918 = vmatpush.msra.mxu0 %v833
        %919 = vmatpush.msra.mxu0 %v831
        %920 = vmatpush.msra.mxu0 %v829
        %921 = vmatpush.msra.mxu0 %v827
        %922 = vmatpush.msra.mxu0 %v825
        %923 = vmatpush.msra.mxu0 %v823
        %924 = vmatpush.msra.mxu0 %v821
        %925 = vmatpush.msra.mxu0 %v819
        %926 = vmatpush.msra.mxu0 %v817
        %927 = vmatpush.msra.mxu0 %v815
        %928 = vmatpush.msra.mxu0 %v813
        %929 = vmatpush.msra.mxu0 %v811
        %930 = vmatmul.f32.gmra.mxu0 %v846
        %v931 = vpop.f32.mrf.mxu0
        %v932 = vadd.f32 %v855, %v931
        %933 = vmatmul.f32.gmra.mxu0 %v848
        %v934 = vpop.f32.mrf.mxu0
        %v935 = vadd.f32 %v860, %v934
        %936 = vdwg.mxu0
        %937 = vmatpush.msra.mxu0 0.0
        %938 = vmatpush.msra.mxu0 0.0
        %939 = vmatpush.msra.mxu0 0.0
        %940 = vmatpush.msra.mxu0 0.0
        %941 = vmatpush.msra.mxu0 0.0
        %942 = vmatpush.msra.mxu0 0.0
        %943 = vmatpush.msra.mxu0 0.0
        %944 = vmatpush.msra.mxu0 0.0
        %945 = vmatpush.msra.mxu0 0.0
        %946 = vmatpush.msra.mxu0 0.0
        %947 = vmatpush.msra.mxu0 0.0
        %948 = vmatpush.msra.mxu0 0.0
        %949 = vmatpush.msra.mxu0 0.0
        %950 = vmatpush.msra.mxu0 0.0
        %951 = vmatpush.msra.mxu0 %v845
        %952 = vmatpush.msra.mxu0 %v843
        %953 = vmatmul.f32.gmra.mxu0 %v863
        %v954 = vpop.f32.mrf.mxu0
        %v955 = vadd.f32 %v932, %v954
        %956 = vmatmul.f32.gmra.mxu0 %v866
        %v957 = vpop.f32.mrf.mxu0
        %v958 = vadd.f32 %v935, %v957
        %959 = vdwg.mxu0
        %v960 = vadd.f32 %v909, %v955
        %961 = vadd.xlane.f32.xlu0 %v960
        %v962 = vpop.xlane.xlu0 %961
        %v963 = vadd.f32 %v912, %v958
        %964 = vadd.xlane.f32.xlu0 %v963
        %v965 = vpop.xlane.xlu0 %964
        %v966 = vrcp.pop 256.0
        %v967 = vmul.f32 256.0, %v966
        %v968 = vsub.f32 1.0, %v967
        %v969 = vmul.f32 %v966, %v968
        %v970 = vadd.f32 %v966, %v969
        %vm971 = vweird.f32 %v966
        %v972 = vsel %vm971, %v966, %v970
        %v973 = vmul.f32 %v962, %v972
        %v974 = vmul.f32 %v965, %v972
        %v975 = vld [vmem:[%s6] sm:$0xff]
        %v976 = vld [vmem:[%s6 + $0x8] sm:$0xff]
        %v977 = vmul.f32 %v973, %v975
        %v978 = vmul.f32 %v974, %v976
        %vm979 = vcmask 15360
        %v980 = vsel %vm979, %v977, 0.0
        %v981 = vsel %vm979, %v978, 0.0
        %v982 = vadd.f32 %v980, %v981
        %v983 = vrot.slane %v982, 4
        %v984 = vadd.f32 %v982, %v983
        %v985 = vrot.slane %v984, 2
        %v986 = vadd.f32 %v984, %v985
        %v987 = vrot.slane %v986, 1
        %v988 = vadd.f32 %v986, %v987
        %v989 = vld [vmem:[%s7] sm:$0x1]
        %v990 = vadd.f32 %v988, %v989
        %v991 = vmax.f32 %v990, 0.0
        %v992 = vld [vmem:[%s8] sm:$0xff]
        %v993 = vld [vmem:[%s8 + $0x8] sm:$0xff]
        %v994 = vperm.slane %v991, 0
        %v995 = vmul.f32 %v994, %v992
        %v996 = vmul.f32 %v994, %v993
        %v997 = vsel %vm979, %v995, 0.0
        %998 = vadd.xlane.f32.xlu0 %v997
        %v999 = vpop.xlane.xlu0 %998
        %v1000 = vsel %vm979, %v996, 0.0
        %1001 = vadd.xlane.f32.xlu0 %v1000
        %v1002 = vpop.xlane.xlu0 %1001
        %v1003 = vld [vmem:[%s9] sm:$0xff]
        %v1004 = vld [vmem:[%s9 + $0x8] sm:$0xff]
        %v1005 = vadd.f32 %v999, %v1003
        %v1006 = vadd.f32 %v1002, %v1004
        %v1007 = vxor.u32 %v1005, 2147483648
        %v1008 = vxor.u32 %v1006, 2147483648
        %v1009 = vmul.f32 %v1007, 1.442695
        %v1010 = vpow.pop %v1009
        %v1011 = vmul.f32 %v1008, 1.442695
        %v1012 = vpow.pop %v1011
        %v1013 = vadd.f32 %v1010, 1.0
        %v1014 = vadd.f32 %v1012, 1.0
        %v1015 = vrcp.pop %v1013
        %v1016 = vmul.f32 %v1013, %v1015
        %v1017 = vsub.f32 1.0, %v1016
        %v1018 = vmul.f32 %v1015, %v1017
        %v1019 = vadd.f32 %v1015, %v1018
        %vm1020 = vweird.f32 %v1013
        %vm1021 = vweird.f32 %v1015
        %vm1022 = vmor %vm1020, %vm1021
        %v1023 = vsel %vm1022, %v1015, %v1019
        %v1024 = vand.u32 2147483647, %v1013
        %vm1025 = vcmp.eq.f32.partialorder %v1024, 8.507059e+37
        %v1026 = vand.u32 %v1013, 2147483648
        %v1027 = vor.u32 1.1754944e-38, %v1026
        %v1028 = vsel %vm1025, %v1027, %v1023
        %v1029 = vmul.f32 1.0, %v1028
        %v1030 = vrcp.pop %v1014
        %v1031 = vmul.f32 %v1014, %v1030
        %v1032 = vsub.f32 1.0, %v1031
        %v1033 = vmul.f32 %v1030, %v1032
        %v1034 = vadd.f32 %v1030, %v1033
        %vm1035 = vweird.f32 %v1014
        %vm1036 = vweird.f32 %v1030
        %vm1037 = vmor %vm1035, %vm1036
        %v1038 = vsel %vm1037, %v1030, %v1034
        %v1039 = vand.u32 2147483647, %v1014
        %vm1040 = vcmp.eq.f32.partialorder %v1039, 8.507059e+37
        %v1041 = vand.u32 %v1014, 2147483648
        %v1042 = vor.u32 1.1754944e-38, %v1041
        %v1043 = vsel %vm1040, %v1042, %v1038
        %v1044 = vmul.f32 1.0, %v1043
        %1046 = vset.pattern.permute.xlu0 0
        %1047 = vperm.xlu0 %1046, %v1029
        %v1048 = vpop.permute.xlu0 %1047
        %1051 = vset.pattern.permute.xlu0 0
        %1052 = vperm.xlu0 %1051, %v1044
        %v1053 = vpop.permute.xlu0 %1052
        %v1055 = vmul.f32 %v909, %v1048
        %v1056 = vmul.f32 %v955, %v1048
        %v1057 = vmul.f32 %v912, %v1053
        %v1058 = vmul.f32 %v958, %v1053
        %v1059 = vadd.f32 %v413, %v1055
        %v1060 = vadd.f32 %v414, %v1056
        %v1061 = vadd.f32 %v415, %v1057
        %v1062 = vadd.f32 %v416, %v1058
        %1063 = vst [vmem:[%s412] sm:$0xff] %v1059
        %1064 = vst [vmem:[%s412 + $0x8] sm:$0xff] %v1060
        %1065 = vst [vmem:[%s412 + $0x10] sm:$0xff] %v1061
        %1066 = vst [vmem:[%s412 + $0x18] sm:$0xff] %v1062
        %s1067 = sand.u32 %s251, 1
        %s1068 = scalar_lea.sflag [#allocation4], %s1067
        %s1069 = sand.u32 %s251, 1
        %s1070 = smul.addr %s1069, 32
        %s1071 = scalar_lea.vmem [#allocation8], %s1070
        // Predicated region
        $region73: #{tpu_custom_call.1} parent=59 // pred_check
          %p1072 = pneg %p261
        $region74: #{tpu_custom_call.1} parent=59 // pred_check_branch
          %1074 = sbr.rel (%p1072) target = $region76
        $region75: #{tpu_custom_call.1} parent=59 // pred_region
          %1076 = vsyncadd %s1068, 0
          %s1077 = smul.addr %s28, 4
          %s1078 = smul.addr %s1077, 8
          %s1079 = scalar_lea.hbm %s10, %s1078
          %s1080 = sshll.u32 %s1071, 4
          %s1081 = int_to_ptr.vmem [resolvable:$true] %s1080
          %s1082 = sshll.u32 %s1079, 4
          %s1083 = int_to_ptr.hbm [resolvable:$true] %s1082
          %1088 = dma.vmem_to_hbm [thread:$0]  %s1081, 512, %s1083, %s1068, 256, 256, 16
        $region76: #{tpu_custom_call.1} parent=59 // pred_fallthru
          _
      $region60: #{tpu_custom_call.1} parent=5 // pred_fallthru
        _
      %p1089 = scmp.le.s32.totalorder 2, %s23
      // Predicated region
      $region77: #{tpu_custom_call.1} parent=5 // pred_check
        %p1090 = pneg %p1089
      $region78: #{tpu_custom_call.1} parent=5 // pred_check_branch
        %1092 = sbr.rel (%p1090) target = $region80
      $region79: #{tpu_custom_call.1} parent=5 // pred_region
        %s1093 = ssub.s32 %s23, 2
        // Predicated region
        $region81: #{tpu_custom_call.1} parent=79 // pred_check
          %p1094 = pneg %p267
        $region82: #{tpu_custom_call.1} parent=79 // pred_check_branch
          %1096 = sbr.rel (%p1094) target = $region84
        $region83: #{tpu_custom_call.1} parent=79 // pred_region
          %s1097 = sand.u32 %s252, 1
          %s1098 = scalar_lea.sflag [#allocation4], %s1097
          %s1099 = sand.u32 %s252, 1
          %s1100 = smul.addr %s1099, 32
          %s1101 = scalar_lea.vmem [#allocation8], %s1100
          %1103 = dma.done %s1098, 512
        $region84: #{tpu_custom_call.1} parent=79 // pred_fallthru
          _
      $region80: #{tpu_custom_call.1} parent=5 // pred_fallthru
        _
    $region6: #{tpu_custom_call.1} parent=1 // loop_footer
      %s27 = sadd.s32 1, %s23
    $region7: #{tpu_custom_call.1} parent=1 // loop_footer_branch
      %22 = sbr.rel target = $region3
    $region8: #{tpu_custom_call.1} parent=1 // loop_exit
      _
    %1104 = vsyncpa [#allocation3], 1
    %s1105 = scalar_lea.sflag [#allocation3], 1
    %1106 = vsyncpa %s1105, 1
    %1107 = vsyncpa [#allocation6], 1
    %1108 = vsyncpa [#allocation4], 1
    %s1109 = scalar_lea.sflag [#allocation4], 1
    %1110 = vsyncpa %s1109, 1

</llo_original>
